<compile_context>
chip_gen: v7x
topology: tpu7x:2x2x1
jax: 0.10.0
libtpu: 0.0.40
codegen_flags: <defaults>
</compile_context>

<pallas_src>
import jax
import jax.numpy as jnp
from jax.experimental import pallas as pl
from jax.experimental.pallas import tpu as pltpu

_LANE = 128
_SUBLANE = 8


def _round_up(x, m):
    return ((x + m - 1) // m) * m


def actor_mlp_kernel(x_ref, w1_ref, b1_ref, w2_ref, b2_ref, w3_ref, b3_ref, o_ref):
    # fc1 + tanh  (bf16 MXU inputs, f32 accumulate, f32 bias/activation)
    h1 = jnp.tanh(
        jnp.dot(x_ref[...].astype(jnp.bfloat16), w1_ref[...],
                preferred_element_type=jnp.float32)
        + b1_ref[...]
    )
    # fc2 + tanh
    h2 = jnp.tanh(
        jnp.dot(h1.astype(jnp.bfloat16), w2_ref[...],
                preferred_element_type=jnp.float32)
        + b2_ref[...]
    )
    # fc3 (logits, no activation — matches ActorNetwork.forward)
    o_ref[...] = (
        jnp.dot(h2.astype(jnp.bfloat16), w3_ref[...],
                preferred_element_type=jnp.float32)
        + b3_ref[...]
    ).astype(o_ref.dtype)


def init_params(key, num_inputs, num_actions, hidden_dim):
    """Deterministic init mimicking torch.nn.Linear's U(-1/sqrt(fan_in), 1/sqrt(fan_in)).

    Weights are stored transposed vs. torch ((in, out) instead of (out, in)) so the
    kernel computes y = x @ W + b directly on the MXU.
    """
    ks = jax.random.split(key, 6)

    def linear(kw, kb, fan_in, fan_out):
        bound = 1.0 / jnp.sqrt(fan_in)
        w = jax.random.uniform(kw, (fan_in, fan_out), jnp.float32, -bound, bound)
        b = jax.random.uniform(kb, (1, fan_out), jnp.float32, -bound, bound)
        return w, b

    w1, b1 = linear(ks[0], ks[1], num_inputs, hidden_dim)
    w2, b2 = linear(ks[2], ks[3], hidden_dim, hidden_dim)
    w3, b3 = linear(ks[4], ks[5], hidden_dim, num_actions)
    return {"w1": w1, "b1": b1, "w2": w2, "b2": b2, "w3": w3, "b3": b3}


def prepare_params(params):
    """Zero-pad hidden/action dims to lane (128) multiples, cast weights to bf16.

    Done once outside the hot path.  Padding with zeros is exact: padded input
    columns are multiplied by zero weights, padded output columns are sliced off.
    """
    w1, b1 = params["w1"], params["b1"]
    w2, b2 = params["w2"], params["b2"]
    w3, b3 = params["w3"], params["b3"]
    num_inputs, hidden = w1.shape
    num_actions = w3.shape[1]
    h_pad = _round_up(hidden, _LANE)
    a_pad = _round_up(num_actions, _LANE)

    def pad2(a, r, c):
        return jnp.pad(a, ((0, r - a.shape[0]), (0, c - a.shape[1])))

    return {
        "w1": pad2(w1, num_inputs, h_pad).astype(jnp.bfloat16),
        "b1": pad2(b1, 1, h_pad).astype(jnp.float32),
        "w2": pad2(w2, h_pad, h_pad).astype(jnp.bfloat16),
        "b2": pad2(b2, 1, h_pad).astype(jnp.float32),
        "w3": pad2(w3, h_pad, a_pad).astype(jnp.bfloat16),
        "b3": pad2(b3, 1, a_pad).astype(jnp.float32),
        "num_actions": num_actions,
    }


def actor_network_forward(state, pparams, *, tb_max=512):
    """state: (B, num_inputs) f32; pparams: output of prepare_params."""
    w1, b1 = pparams["w1"], pparams["b1"]
    w2, b2 = pparams["w2"], pparams["b2"]
    w3, b3 = pparams["w3"], pparams["b3"]
    num_actions = pparams["num_actions"]

    B, num_inputs = state.shape
    h_pad = w1.shape[1]
    a_pad = w3.shape[1]

    # Batch tile: large enough to pipeline/amortize per-step overhead, small enough
    # for v7x's 64 MiB VMEM; multiple of 8 (sublane) always.
    tb = tb_max if B >= tb_max else _round_up(B, _SUBLANE)
    b_pad = _round_up(B, tb)
    if b_pad != B:
        state = jnp.pad(state, ((0, b_pad - B), (0, 0)))
    grid = (b_pad // tb,)

    # Explicit scoped-VMEM budget: double-buffered x/out tiles + resident weights.
    x_tile_bytes = tb * num_inputs * 4
    out_tile_bytes = tb * a_pad * 4
    w_bytes = (num_inputs * h_pad + h_pad * h_pad + h_pad * a_pad) * 2  # bf16
    b_bytes = (2 * h_pad + a_pad) * 4
    vmem_limit = min(2 * (x_tile_bytes + out_tile_bytes) + 2 * (w_bytes + b_bytes)
                     + (8 << 20), 96 << 20)

    flops = 2 * b_pad * (num_inputs * h_pad + h_pad * h_pad + h_pad * a_pad)
    bytes_accessed = (b_pad * num_inputs * 4 + b_pad * a_pad * 4
                      + w_bytes + b_bytes)
    cost = pl.CostEstimate(flops=flops,
                           transcendentals=2 * b_pad * h_pad,
                           bytes_accessed=bytes_accessed)

    out = pl.pallas_call(
        actor_mlp_kernel,
        out_shape=jax.ShapeDtypeStruct((b_pad, a_pad), jnp.float32),
        grid=grid,
        in_specs=[
            pl.BlockSpec((tb, num_inputs), lambda i: (i, 0)),      # state (tiled)
            pl.BlockSpec((num_inputs, h_pad), lambda i: (0, 0)),   # w1 (resident)
            pl.BlockSpec((1, h_pad), lambda i: (0, 0)),            # b1
            pl.BlockSpec((h_pad, h_pad), lambda i: (0, 0)),        # w2
            pl.BlockSpec((1, h_pad), lambda i: (0, 0)),            # b2
            pl.BlockSpec((h_pad, a_pad), lambda i: (0, 0)),        # w3
            pl.BlockSpec((1, a_pad), lambda i: (0, 0)),            # b3
        ],
        out_specs=pl.BlockSpec((tb, a_pad), lambda i: (i, 0)),
        compiler_params=pltpu.CompilerParams(
            dimension_semantics=("parallel",),
            vmem_limit_bytes=vmem_limit,
        ),
        cost_estimate=cost,
    )(state, w1, b1, w2, b2, w3, b3)

    return out[:B, :num_actions]


def reference_forward(state, params):
    h1 = jnp.tanh(state @ params["w1"] + params["b1"])
    h2 = jnp.tanh(h1 @ params["w2"] + params["b2"])
    return h2 @ params["w3"] + params["b3"]


if __name__ == "__main__":
    # Small shapes consistent with the module: flat state features -> action logits.
    batch, num_inputs, num_actions, hidden_dim = 8, 16, 8, 32

    key = jax.random.PRNGKey(0)
    k_state, k_params = jax.random.split(key)
    state = jax.random.normal(k_state, (batch, num_inputs), jnp.float32)
    params = init_params(k_params, num_inputs, num_actions, hidden_dim)
    pparams = prepare_params(params)

    logits = actor_network_forward(state, pparams)
    jax.block_until_ready(logits)

    # Sanity-check against a pure-JAX f32 reference of the same math.
    # Tolerance relaxed vs. the original 1e-5 because the kernel feeds bf16 into
    # the MXU (f32 accumulation) per the performance review.
    ref = reference_forward(state, params)
    assert logits.shape == (batch, num_actions)
    assert jnp.allclose(logits, ref, atol=5e-2, rtol=5e-2), (
        float(jnp.max(jnp.abs(logits - ref))))

    print("KERNEL_OK")
</pallas_src>

<mosaic_0001>
module attributes {stable_mosaic.version = 11 : i64} {
  func.func @actor_mlp_kernel(%arg0: i32, %arg1: memref<8x16xf32, #tpu.memory_space<vmem>>, %arg2: memref<16x128xbf16, #tpu.memory_space<vmem>>, %arg3: memref<1x128xf32, #tpu.memory_space<vmem>>, %arg4: memref<128x128xbf16, #tpu.memory_space<vmem>>, %arg5: memref<1x128xf32, #tpu.memory_space<vmem>>, %arg6: memref<128x128xbf16, #tpu.memory_space<vmem>>, %arg7: memref<1x128xf32, #tpu.memory_space<vmem>>, %arg8: memref<8x128xf32, #tpu.memory_space<vmem>>) attributes {dimension_semantics = [#tpu.dimension_semantics<parallel>], iteration_bounds = array<i64: 1>, scalar_prefetch = 0 : i64, scratch_operands = 0 : i64, tpu.core_type = #tpu.core_type<tc>, window_params = [{transform_indices = @transform_0, window_bounds = array<i64: 8, 16>}, {pipeline_mode = #tpu.pipeline_mode<synchronous>, transform_indices = @transform_1, window_bounds = array<i64: 16, 128>}, {pipeline_mode = #tpu.pipeline_mode<synchronous>, transform_indices = @transform_2, window_bounds = array<i64: 1, 128>}, {pipeline_mode = #tpu.pipeline_mode<synchronous>, transform_indices = @transform_3, window_bounds = array<i64: 128, 128>}, {pipeline_mode = #tpu.pipeline_mode<synchronous>, transform_indices = @transform_4, window_bounds = array<i64: 1, 128>}, {pipeline_mode = #tpu.pipeline_mode<synchronous>, transform_indices = @transform_5, window_bounds = array<i64: 128, 128>}, {pipeline_mode = #tpu.pipeline_mode<synchronous>, transform_indices = @transform_6, window_bounds = array<i64: 1, 128>}, {transform_indices = @transform_7, window_bounds = array<i64: 8, 128>}]} {
    %c0 = arith.constant 0 : index
    %c0_0 = arith.constant 0 : index
    %0 = vector.load %arg1[%c0, %c0_0] : memref<8x16xf32, #tpu.memory_space<vmem>>, vector<8x16xf32>
    %1 = arith.truncf %0 : vector<8x16xf32> to vector<8x16xbf16>
    %c0_1 = arith.constant 0 : index
    %c0_2 = arith.constant 0 : index
    %2 = vector.load %arg2[%c0_1, %c0_2] : memref<16x128xbf16, #tpu.memory_space<vmem>>, vector<16x128xbf16>
    %cst = arith.constant dense<0.000000e+00> : vector<8x128xf32>
    %3 = tpu.matmul %1, %2, %cst {dimension_numbers = #tpu.dot_dimension_numbers<[1], [0], [0], [1], [0, 0, 1, 1], [], []>} : vector<8x16xbf16>, vector<16x128xbf16>, vector<8x128xf32> -> vector<8x128xf32>
    %c0_3 = arith.constant 0 : index
    %c0_4 = arith.constant 0 : index
    %4 = vector.load %arg3[%c0_3, %c0_4] : memref<1x128xf32, #tpu.memory_space<vmem>>, vector<1x128xf32>
    %5 = vector.broadcast %4 : vector<1x128xf32> to vector<8x128xf32>
    %6 = arith.addf %3, %5 : vector<8x128xf32>
    %7 = math.tanh %6 : vector<8x128xf32>
    %8 = arith.truncf %7 : vector<8x128xf32> to vector<8x128xbf16>
    %c0_5 = arith.constant 0 : index
    %c0_6 = arith.constant 0 : index
    %9 = vector.load %arg4[%c0_5, %c0_6] : memref<128x128xbf16, #tpu.memory_space<vmem>>, vector<128x128xbf16>
    %cst_7 = arith.constant dense<0.000000e+00> : vector<8x128xf32>
    %10 = tpu.matmul %8, %9, %cst_7 {dimension_numbers = #tpu.dot_dimension_numbers<[1], [0], [0], [1], [0, 0, 1, 1], [], []>} : vector<8x128xbf16>, vector<128x128xbf16>, vector<8x128xf32> -> vector<8x128xf32>
    %c0_8 = arith.constant 0 : index
    %c0_9 = arith.constant 0 : index
    %11 = vector.load %arg5[%c0_8, %c0_9] : memref<1x128xf32, #tpu.memory_space<vmem>>, vector<1x128xf32>
    %12 = vector.broadcast %11 : vector<1x128xf32> to vector<8x128xf32>
    %13 = arith.addf %10, %12 : vector<8x128xf32>
    %14 = math.tanh %13 : vector<8x128xf32>
    %15 = arith.truncf %14 : vector<8x128xf32> to vector<8x128xbf16>
    %c0_10 = arith.constant 0 : index
    %c0_11 = arith.constant 0 : index
    %16 = vector.load %arg6[%c0_10, %c0_11] : memref<128x128xbf16, #tpu.memory_space<vmem>>, vector<128x128xbf16>
    %cst_12 = arith.constant dense<0.000000e+00> : vector<8x128xf32>
    %17 = tpu.matmul %15, %16, %cst_12 {dimension_numbers = #tpu.dot_dimension_numbers<[1], [0], [0], [1], [0, 0, 1, 1], [], []>} : vector<8x128xbf16>, vector<128x128xbf16>, vector<8x128xf32> -> vector<8x128xf32>
    %c0_13 = arith.constant 0 : index
    %c0_14 = arith.constant 0 : index
    %18 = vector.load %arg7[%c0_13, %c0_14] : memref<1x128xf32, #tpu.memory_space<vmem>>, vector<1x128xf32>
    %19 = vector.broadcast %18 : vector<1x128xf32> to vector<8x128xf32>
    %20 = arith.addf %17, %19 : vector<8x128xf32>
    %c0_15 = arith.constant 0 : index
    %c0_16 = arith.constant 0 : index
    %21 = vector.load %arg8[%c0_15, %c0_16] : memref<8x128xf32, #tpu.memory_space<vmem>>, vector<8x128xf32>
    tpu.vector_store %arg8[%c0_15, %c0_16], %20 {strides = array<i32>} : memref<8x128xf32, #tpu.memory_space<vmem>>, vector<8x128xf32>,
    return
  }
  func.func @transform_0(%arg0: i32) -> (i32, i32) {
    %c0_i32 = arith.constant 0 : i32
    %c0_i32_0 = arith.constant 0 : i32
    return %arg0, %c0_i32 : i32, i32
  }
  func.func @transform_1(%arg0: i32) -> (i32, i32) {
    %c0_i32 = arith.constant 0 : i32
    %c0_i32_0 = arith.constant 0 : i32
    %c0_i32_1 = arith.constant 0 : i32
    return %c0_i32, %c0_i32_0 : i32, i32
  }
  func.func @transform_2(%arg0: i32) -> (i32, i32) {
    %c0_i32 = arith.constant 0 : i32
    %c0_i32_0 = arith.constant 0 : i32
    %c0_i32_1 = arith.constant 0 : i32
    return %c0_i32, %c0_i32_0 : i32, i32
  }
  func.func @transform_3(%arg0: i32) -> (i32, i32) {
    %c0_i32 = arith.constant 0 : i32
    %c0_i32_0 = arith.constant 0 : i32
    %c0_i32_1 = arith.constant 0 : i32
    return %c0_i32, %c0_i32_0 : i32, i32
  }
  func.func @transform_4(%arg0: i32) -> (i32, i32) {
    %c0_i32 = arith.constant 0 : i32
    %c0_i32_0 = arith.constant 0 : i32
    %c0_i32_1 = arith.constant 0 : i32
    return %c0_i32, %c0_i32_0 : i32, i32
  }
  func.func @transform_5(%arg0: i32) -> (i32, i32) {
    %c0_i32 = arith.constant 0 : i32
    %c0_i32_0 = arith.constant 0 : i32
    %c0_i32_1 = arith.constant 0 : i32
    return %c0_i32, %c0_i32_0 : i32, i32
  }
  func.func @transform_6(%arg0: i32) -> (i32, i32) {
    %c0_i32 = arith.constant 0 : i32
    %c0_i32_0 = arith.constant 0 : i32
    %c0_i32_1 = arith.constant 0 : i32
    return %c0_i32, %c0_i32_0 : i32, i32
  }
  func.func @transform_7(%arg0: i32) -> (i32, i32) {
    %c0_i32 = arith.constant 0 : i32
    %c0_i32_0 = arith.constant 0 : i32
    return %arg0, %c0_i32 : i32, i32
  }
}

</mosaic_0001>

<llo_original>
// kernel: tpu_custom_call.1
$region0: #{tpu_custom_call.1}
  #allocation0 [shape = 'u32[]', space=smem, size = 0x4, offset = 0x4, fixed_abs, tag = 'smem constant byte address 0x4 - core index']
  #allocation1 [shape = 'u32[144,128]{1,0:T(1,128)}', space=vmem, size = 0x12000, scoped, tag = 'internal scratch']
  %s0 = inlined_call_operand.hbm [shape: f32[8,16], index: 0, kind: input, shape index: {}]
  %s1 = inlined_call_operand.hbm [shape: bf16[16,128], index: 1, kind: input, shape index: {}]
  %s2 = inlined_call_operand.vmem [shape: f32[1,128], index: 2, kind: input, shape index: {}]
  %s3 = inlined_call_operand.hbm [shape: bf16[128,128], index: 3, kind: input, shape index: {}]
  %s4 = inlined_call_operand.vmem [shape: f32[1,128], index: 4, kind: input, shape index: {}]
  %s5 = inlined_call_operand.hbm [shape: bf16[128,128], index: 5, kind: input, shape index: {}]
  %s6 = inlined_call_operand.vmem [shape: f32[1,128], index: 6, kind: input, shape index: {}]
  %s7 = inlined_call_operand.hbm [shape: f32[8,128], index: 7, kind: output, shape index: {}]
  %s8 = sld [smem:[#allocation0]]
  $region54: #{tpu_custom_call.1} parent=0
    _
  %s10 = ssub.s32 1, %s8
  %s11 = scalar_select 0, %s10, %s8
  $region1: #{tpu_custom_call.1} parent=0
    #allocation2 [shape = 'u8[4096]{0}', space=vmem, size = 0x1000, scoped, tag = 'input window, operand 0, single buffered']
    #allocation3 [shape = 's32[1]{0}', space=sflag, size = 0x4, scoped, tag = 'scoped memory for tpu_custom_call.1']
    #allocation4 [shape = 's32[1]{0}', space=sflag, size = 0x4, scoped, tag = 'scoped memory for tpu_custom_call.1']
    #allocation5 [shape = 'u8[4096]{0}', space=vmem, size = 0x1000, scoped, tag = 'input window, operand 1, single buffered']
    #allocation6 [shape = 's32[1]{0}', space=sflag, size = 0x4, scoped, tag = 'scoped memory for tpu_custom_call.1']
    #allocation7 [shape = 'u8[32768]{0}', space=vmem, size = 0x8000, scoped, tag = 'input window, operand 3, single buffered']
    #allocation8 [shape = 'u8[32768]{0}', space=vmem, size = 0x8000, scoped, tag = 'input window, operand 5, single buffered']
    #allocation9 [shape = 's32[1]{0}', space=sflag, size = 0x4, scoped, tag = 'scoped memory for tpu_custom_call.1']
    #allocation10 [shape = 'u8[4096]{0}', space=vmem, size = 0x1000, scoped, tag = 'output window, operand 0, single buffered']
    %12 = vsyncpa [#allocation3], 0
    %13 = vsyncpa [#allocation6], 0
    %14 = vsyncpa [#allocation9], 0
    %15 = vsyncpa [#allocation4], 0
    // Predicated region
    $region2: #{tpu_custom_call.1} parent=1 // pred_check
      _
    $region3: #{tpu_custom_call.1} parent=1 // pred_check_branch
      %17 = sbr.rel (0) target = $region5
    $region4: #{tpu_custom_call.1} parent=1 // pred_region
      %s19 = ssub.s32 128, 128
      %20 = vsyncadd [#allocation3], %s19
      %s22 = sshll.u32 [#allocation2], 4
      %s23 = int_to_ptr.vmem [resolvable:$true] %s22
      %25 = dma.hbm_to_vmem [thread:$0]  %s0, 128, %s23, [#allocation3]
    $region5: #{tpu_custom_call.1} parent=1 // pred_fallthru
      _
    // Predicated region
    $region6: #{tpu_custom_call.1} parent=1 // pred_check
      _
    $region7: #{tpu_custom_call.1} parent=1 // pred_check_branch
      %27 = sbr.rel (0) target = $region9
    $region8: #{tpu_custom_call.1} parent=1 // pred_region
      %s29 = ssub.s32 128, 128
      %30 = vsyncadd [#allocation6], %s29
      %s31 = sshll.u32 [#allocation5], 4
      %s32 = int_to_ptr.vmem [resolvable:$true] %s31
      %37 = dma.hbm_to_vmem [thread:$0]  %s1, 128, %s32, [#allocation6], 64, 64, 4
    $region9: #{tpu_custom_call.1} parent=1 // pred_fallthru
      _
    // Predicated region
    $region10: #{tpu_custom_call.1} parent=1 // pred_check
      _
    $region11: #{tpu_custom_call.1} parent=1 // pred_check_branch
      %39 = sbr.rel (0) target = $region13
    $region12: #{tpu_custom_call.1} parent=1 // pred_region
      _
    $region13: #{tpu_custom_call.1} parent=1 // pred_fallthru
      _
    // Predicated region
    $region14: #{tpu_custom_call.1} parent=1 // pred_check
      _
    $region15: #{tpu_custom_call.1} parent=1 // pred_check_branch
      %41 = sbr.rel (0) target = $region17
    $region16: #{tpu_custom_call.1} parent=1 // pred_region
      %s43 = ssub.s32 1024, 1024
      %44 = vsyncadd [#allocation6], %s43
      %s45 = sshll.u32 [#allocation7], 4
      %s46 = int_to_ptr.vmem [resolvable:$true] %s45
      %51 = dma.hbm_to_vmem [thread:$0]  %s3, 1024, %s46, [#allocation6], 64, 64, 4
    $region17: #{tpu_custom_call.1} parent=1 // pred_fallthru
      _
    // Predicated region
    $region18: #{tpu_custom_call.1} parent=1 // pred_check
      _
    $region19: #{tpu_custom_call.1} parent=1 // pred_check_branch
      %53 = sbr.rel (0) target = $region21
    $region20: #{tpu_custom_call.1} parent=1 // pred_region
      _
    $region21: #{tpu_custom_call.1} parent=1 // pred_fallthru
      _
    // Predicated region
    $region22: #{tpu_custom_call.1} parent=1 // pred_check
      _
    $region23: #{tpu_custom_call.1} parent=1 // pred_check_branch
      %55 = sbr.rel (0) target = $region25
    $region24: #{tpu_custom_call.1} parent=1 // pred_region
      %s57 = ssub.s32 1024, 1024
      %58 = vsyncadd [#allocation9], %s57
      %s59 = sshll.u32 [#allocation8], 4
      %s60 = int_to_ptr.vmem [resolvable:$true] %s59
      %65 = dma.hbm_to_vmem [thread:$0]  %s5, 1024, %s60, [#allocation9], 64, 64, 4
    $region25: #{tpu_custom_call.1} parent=1 // pred_fallthru
      _
    // Predicated region
    $region26: #{tpu_custom_call.1} parent=1 // pred_check
      _
    $region27: #{tpu_custom_call.1} parent=1 // pred_check_branch
      %67 = sbr.rel (0) target = $region29
    $region28: #{tpu_custom_call.1} parent=1 // pred_region
      _
    $region29: #{tpu_custom_call.1} parent=1 // pred_fallthru
      _
    // Predicated region
    $region30: #{tpu_custom_call.1} parent=1 // pred_check
      _
    $region31: #{tpu_custom_call.1} parent=1 // pred_check_branch
      %69 = sbr.rel (0) target = $region33
    $region32: #{tpu_custom_call.1} parent=1 // pred_region
      %70 = dma.done [#allocation3], 128
    $region33: #{tpu_custom_call.1} parent=1 // pred_fallthru
      _
    // Predicated region
    $region34: #{tpu_custom_call.1} parent=1 // pred_check
      _
    $region35: #{tpu_custom_call.1} parent=1 // pred_check_branch
      %72 = sbr.rel (0) target = $region37
    $region36: #{tpu_custom_call.1} parent=1 // pred_region
      %73 = dma.done [#allocation6], 128
    $region37: #{tpu_custom_call.1} parent=1 // pred_fallthru
      _
    // Predicated region
    $region38: #{tpu_custom_call.1} parent=1 // pred_check
      _
    $region39: #{tpu_custom_call.1} parent=1 // pred_check_branch
      %75 = sbr.rel (0) target = $region41
    $region40: #{tpu_custom_call.1} parent=1 // pred_region
      %76 = dma.done [#allocation6], 1024
    $region41: #{tpu_custom_call.1} parent=1 // pred_fallthru
      _
    // Predicated region
    $region42: #{tpu_custom_call.1} parent=1 // pred_check
      _
    $region43: #{tpu_custom_call.1} parent=1 // pred_check_branch
      %78 = sbr.rel (0) target = $region45
    $region44: #{tpu_custom_call.1} parent=1 // pred_region
      %79 = dma.done [#allocation9], 1024
    $region45: #{tpu_custom_call.1} parent=1 // pred_fallthru
      _
    %v81 = vld [vmem:[#allocation2] sm:$0xff]
    %v82 = vpack.c.bf16 %v81, %v81
    %v83 = vld [vmem:[#allocation5] sm:$0xf]
    %v84 = vld [vmem:[#allocation5 + $0x4] sm:$0xf]
    %v85 = vld [vmem:[%s2] sm:$0x1]
    %v87 = vlaneseq
    %v88 = vshrl.u32 %v87, 7
    %v89 = vsub.s32 0, %v88
    %v90 = vrot.slane %v85, %v89
    %v94 = vunpack.c.l.b16 %v83
    %v95 = vunpack.c.l.b16 %v84
    %v96 = vpack.c.b16 %v95, %v94
    %vm98 = vcmask 130048
    %v100 = vsel %vm98, %v82, 0
    %102 = vmatprep.subr.bf16.mxu0 0
    %103 = vmatpush1.bf16.msra.mxu0 %v96
    %104 = vmatprep.subr.bf16.mxu0 0
    %105 = vmatpush1.bf16.msra.mxu0 0
    %106 = vmatprep.subr.bf16.mxu0 0
    %107 = vmatpush1.bf16.msra.mxu0 0
    %108 = vmatprep.subr.bf16.mxu0 0
    %109 = vmatpush1.bf16.msra.mxu0 0
    %110 = vmatprep.subr.bf16.mxu0 0
    %111 = vmatpush1.bf16.msra.mxu0 0
    %112 = vmatprep.subr.bf16.mxu0 0
    %113 = vmatpush1.bf16.msra.mxu0 0
    %114 = vmatprep.subr.bf16.mxu0 0
    %115 = vmatpush1.bf16.msra.mxu0 0
    %116 = vmatprep.subr.bf16.mxu0 0
    %117 = vmatpush1.bf16.msra.mxu0 0
    %118 = vmatprep.subr.bf16.mxu0 0
    %119 = vmatpush1.bf16.msra.mxu0 0
    %120 = vmatprep.subr.bf16.mxu0 0
    %121 = vmatpush1.bf16.msra.mxu0 0
    %122 = vmatprep.subr.bf16.mxu0 0
    %123 = vmatpush1.bf16.msra.mxu0 0
    %124 = vmatprep.subr.bf16.mxu0 0
    %125 = vmatpush1.bf16.msra.mxu0 0
    %126 = vmatprep.subr.bf16.mxu0 0
    %127 = vmatpush1.bf16.msra.mxu0 0
    %128 = vmatprep.subr.bf16.mxu0 0
    %129 = vmatpush1.bf16.msra.mxu0 0
    %130 = vmatprep.subr.bf16.mxu0 0
    %131 = vmatpush1.bf16.msra.mxu0 0
    %132 = vmatprep.subr.bf16.mxu0 0
    %133 = vmatpush1.bf16.msra.mxu0 0
    %134 = vmatprep.mubr.bf16.mxu0 0
    %135 = vmatmul.mubr.bf16.gmra.mrb[0].mxu0 %v100
    %v136 = vpop.f32.mrb[0].mxu0
    %v137 = vadd.f32 %v90, %v136
    %v138 = vpop.f32.mrb[0].mxu0
    %v139 = vpop.f32.mrb[0].mxu0
    %v140 = vpop.f32.mrb[0].mxu0
    %141 = vdwg.mxu0
    %v142 = vtanh.pop %v137
    %v143 = vpack.c.bf16 %v142, %v142
    %v144 = vld [vmem:[#allocation7] sm:$0xf]
    %v145 = vld [vmem:[#allocation7 + $0x4] sm:$0xf]
    %v146 = vld [vmem:[#allocation7 + $0x8] sm:$0xf]
    %v147 = vld [vmem:[#allocation7 + $0xc] sm:$0xf]
    %v148 = vld [vmem:[#allocation7 + $0x10] sm:$0xf]
    %v149 = vld [vmem:[#allocation7 + $0x14] sm:$0xf]
    %v150 = vld [vmem:[#allocation7 + $0x18] sm:$0xf]
    %v151 = vld [vmem:[#allocation7 + $0x1c] sm:$0xf]
    %v152 = vld [vmem:[#allocation7 + $0x20] sm:$0xf]
    %v153 = vld [vmem:[#allocation7 + $0x24] sm:$0xf]
    %v154 = vld [vmem:[#allocation7 + $0x28] sm:$0xf]
    %v155 = vld [vmem:[#allocation7 + $0x2c] sm:$0xf]
    %v156 = vld [vmem:[#allocation7 + $0x30] sm:$0xf]
    %v157 = vld [vmem:[#allocation7 + $0x34] sm:$0xf]
    %v158 = vld [vmem:[#allocation7 + $0x38] sm:$0xf]
    %v159 = vld [vmem:[#allocation7 + $0x3c] sm:$0xf]
    %v160 = vld [vmem:[%s4] sm:$0x1]
    %v162 = vlaneseq
    %v163 = vshrl.u32 %v162, 7
    %v164 = vsub.s32 0, %v163
    %v165 = vrot.slane %v160, %v164
    %v183 = vunpack.c.l.b16 %v144
    %v184 = vunpack.c.l.b16 %v145
    %v185 = vunpack.c.l.b16 %v146
    %v186 = vunpack.c.l.b16 %v147
    %v187 = vunpack.c.l.b16 %v148
    %v188 = vunpack.c.l.b16 %v149
    %v189 = vunpack.c.l.b16 %v150
    %v190 = vunpack.c.l.b16 %v151
    %v191 = vunpack.c.l.b16 %v152
    %v192 = vunpack.c.l.b16 %v153
    %v193 = vunpack.c.l.b16 %v154
    %v194 = vunpack.c.l.b16 %v155
    %v195 = vunpack.c.l.b16 %v156
    %v196 = vunpack.c.l.b16 %v157
    %v197 = vunpack.c.l.b16 %v158
    %v198 = vunpack.c.l.b16 %v159
    %v199 = vpack.c.b16 %v184, %v183
    %v200 = vpack.c.b16 %v186, %v185
    %v201 = vpack.c.b16 %v188, %v187
    %v202 = vpack.c.b16 %v190, %v189
    %v203 = vpack.c.b16 %v192, %v191
    %v204 = vpack.c.b16 %v194, %v193
    %v205 = vpack.c.b16 %v196, %v195
    %v206 = vpack.c.b16 %v198, %v197
    %215 = vmatprep.subr.bf16.mxu0 0
    %216 = vmatpush1.bf16.msra.mxu0 %v199
    %217 = vmatprep.subr.bf16.mxu0 0
    %218 = vmatpush1.bf16.msra.mxu0 %v200
    %219 = vmatprep.subr.bf16.mxu0 0
    %220 = vmatpush1.bf16.msra.mxu0 %v201
    %221 = vmatprep.subr.bf16.mxu0 0
    %222 = vmatpush1.bf16.msra.mxu0 %v202
    %223 = vmatprep.subr.bf16.mxu0 0
    %224 = vmatpush1.bf16.msra.mxu0 %v203
    %225 = vmatprep.subr.bf16.mxu0 0
    %226 = vmatpush1.bf16.msra.mxu0 %v204
    %227 = vmatprep.subr.bf16.mxu0 0
    %228 = vmatpush1.bf16.msra.mxu0 %v205
    %229 = vmatprep.subr.bf16.mxu0 0
    %230 = vmatpush1.bf16.msra.mxu0 %v206
    %231 = vmatprep.subr.bf16.mxu0 0
    %232 = vmatpush1.bf16.msra.mxu0 0
    %233 = vmatprep.subr.bf16.mxu0 0
    %234 = vmatpush1.bf16.msra.mxu0 0
    %235 = vmatprep.subr.bf16.mxu0 0
    %236 = vmatpush1.bf16.msra.mxu0 0
    %237 = vmatprep.subr.bf16.mxu0 0
    %238 = vmatpush1.bf16.msra.mxu0 0
    %239 = vmatprep.subr.bf16.mxu0 0
    %240 = vmatpush1.bf16.msra.mxu0 0
    %241 = vmatprep.subr.bf16.mxu0 0
    %242 = vmatpush1.bf16.msra.mxu0 0
    %243 = vmatprep.subr.bf16.mxu0 0
    %244 = vmatpush1.bf16.msra.mxu0 0
    %245 = vmatprep.subr.bf16.mxu0 0
    %246 = vmatpush1.bf16.msra.mxu0 0
    %247 = vmatprep.mubr.bf16.mxu0 0
    %248 = vmatmul.mubr.bf16.gmra.mrb[0].mxu0 %v143
    %v249 = vpop.f32.mrb[0].mxu0
    %v250 = vadd.f32 %v165, %v249
    %v251 = vpop.f32.mrb[0].mxu0
    %v252 = vpop.f32.mrb[0].mxu0
    %v253 = vpop.f32.mrb[0].mxu0
    %254 = vdwg.mxu0
    %v255 = vtanh.pop %v250
    %v256 = vpack.c.bf16 %v255, %v255
    %v257 = vld [vmem:[#allocation8] sm:$0xf]
    %v258 = vld [vmem:[#allocation8 + $0x4] sm:$0xf]
    %v259 = vld [vmem:[#allocation8 + $0x8] sm:$0xf]
    %v260 = vld [vmem:[#allocation8 + $0xc] sm:$0xf]
    %v261 = vld [vmem:[#allocation8 + $0x10] sm:$0xf]
    %v262 = vld [vmem:[#allocation8 + $0x14] sm:$0xf]
    %v263 = vld [vmem:[#allocation8 + $0x18] sm:$0xf]
    %v264 = vld [vmem:[#allocation8 + $0x1c] sm:$0xf]
    %v265 = vld [vmem:[#allocation8 + $0x20] sm:$0xf]
    %v266 = vld [vmem:[#allocation8 + $0x24] sm:$0xf]
    %v267 = vld [vmem:[#allocation8 + $0x28] sm:$0xf]
    %v268 = vld [vmem:[#allocation8 + $0x2c] sm:$0xf]
    %v269 = vld [vmem:[#allocation8 + $0x30] sm:$0xf]
    %v270 = vld [vmem:[#allocation8 + $0x34] sm:$0xf]
    %v271 = vld [vmem:[#allocation8 + $0x38] sm:$0xf]
    %v272 = vld [vmem:[#allocation8 + $0x3c] sm:$0xf]
    %v273 = vld [vmem:[%s6] sm:$0x1]
    %v275 = vlaneseq
    %v276 = vshrl.u32 %v275, 7
    %v277 = vsub.s32 0, %v276
    %v278 = vrot.slane %v273, %v277
    %v296 = vunpack.c.l.b16 %v257
    %v297 = vunpack.c.l.b16 %v258
    %v298 = vunpack.c.l.b16 %v259
    %v299 = vunpack.c.l.b16 %v260
    %v300 = vunpack.c.l.b16 %v261
    %v301 = vunpack.c.l.b16 %v262
    %v302 = vunpack.c.l.b16 %v263
    %v303 = vunpack.c.l.b16 %v264
    %v304 = vunpack.c.l.b16 %v265
    %v305 = vunpack.c.l.b16 %v266
    %v306 = vunpack.c.l.b16 %v267
    %v307 = vunpack.c.l.b16 %v268
    %v308 = vunpack.c.l.b16 %v269
    %v309 = vunpack.c.l.b16 %v270
    %v310 = vunpack.c.l.b16 %v271
    %v311 = vunpack.c.l.b16 %v272
    %v312 = vpack.c.b16 %v297, %v296
    %v313 = vpack.c.b16 %v299, %v298
    %v314 = vpack.c.b16 %v301, %v300
    %v315 = vpack.c.b16 %v303, %v302
    %v316 = vpack.c.b16 %v305, %v304
    %v317 = vpack.c.b16 %v307, %v306
    %v318 = vpack.c.b16 %v309, %v308
    %v319 = vpack.c.b16 %v311, %v310
    %328 = vmatprep.subr.bf16.mxu0 0
    %329 = vmatpush1.bf16.msra.mxu0 %v312
    %330 = vmatprep.subr.bf16.mxu0 0
    %331 = vmatpush1.bf16.msra.mxu0 %v313
    %332 = vmatprep.subr.bf16.mxu0 0
    %333 = vmatpush1.bf16.msra.mxu0 %v314
    %334 = vmatprep.subr.bf16.mxu0 0
    %335 = vmatpush1.bf16.msra.mxu0 %v315
    %336 = vmatprep.subr.bf16.mxu0 0
    %337 = vmatpush1.bf16.msra.mxu0 %v316
    %338 = vmatprep.subr.bf16.mxu0 0
    %339 = vmatpush1.bf16.msra.mxu0 %v317
    %340 = vmatprep.subr.bf16.mxu0 0
    %341 = vmatpush1.bf16.msra.mxu0 %v318
    %342 = vmatprep.subr.bf16.mxu0 0
    %343 = vmatpush1.bf16.msra.mxu0 %v319
    %344 = vmatprep.subr.bf16.mxu0 0
    %345 = vmatpush1.bf16.msra.mxu0 0
    %346 = vmatprep.subr.bf16.mxu0 0
    %347 = vmatpush1.bf16.msra.mxu0 0
    %348 = vmatprep.subr.bf16.mxu0 0
    %349 = vmatpush1.bf16.msra.mxu0 0
    %350 = vmatprep.subr.bf16.mxu0 0
    %351 = vmatpush1.bf16.msra.mxu0 0
    %352 = vmatprep.subr.bf16.mxu0 0
    %353 = vmatpush1.bf16.msra.mxu0 0
    %354 = vmatprep.subr.bf16.mxu0 0
    %355 = vmatpush1.bf16.msra.mxu0 0
    %356 = vmatprep.subr.bf16.mxu0 0
    %357 = vmatpush1.bf16.msra.mxu0 0
    %358 = vmatprep.subr.bf16.mxu0 0
    %359 = vmatpush1.bf16.msra.mxu0 0
    %360 = vmatprep.mubr.bf16.mxu0 0
    %361 = vmatmul.mubr.bf16.gmra.mrb[0].mxu0 %v256
    %v362 = vpop.f32.mrb[0].mxu0
    %v363 = vadd.f32 %v278, %v362
    %v364 = vpop.f32.mrb[0].mxu0
    %v365 = vpop.f32.mrb[0].mxu0
    %v366 = vpop.f32.mrb[0].mxu0
    %367 = vdwg.mxu0
    %368 = vst [vmem:[#allocation10] sm:$0xff] %v363
    // Predicated region
    $region46: #{tpu_custom_call.1} parent=1 // pred_check
      _
    $region47: #{tpu_custom_call.1} parent=1 // pred_check_branch
      %370 = sbr.rel (0) target = $region49
    $region48: #{tpu_custom_call.1} parent=1 // pred_region
      %s372 = ssub.s32 128, 128
      %373 = vsyncadd [#allocation4], %s372
      %s375 = sshll.u32 [#allocation10], 4
      %s376 = int_to_ptr.vmem [resolvable:$true] %s375
      %378 = dma.vmem_to_hbm [thread:$0]  %s376, 128, %s7, [#allocation4]
    $region49: #{tpu_custom_call.1} parent=1 // pred_fallthru
      _
    // Predicated region
    $region50: #{tpu_custom_call.1} parent=1 // pred_check
      _
    $region51: #{tpu_custom_call.1} parent=1 // pred_check_branch
      %380 = sbr.rel (0) target = $region53
    $region52: #{tpu_custom_call.1} parent=1 // pred_region
      %381 = dma.done [#allocation4], 128
    $region53: #{tpu_custom_call.1} parent=1 // pred_fallthru
      _
    %382 = vsyncpa [#allocation3], 1
    %383 = vsyncpa [#allocation6], 1
    %384 = vsyncpa [#allocation9], 1
    %385 = vsyncpa [#allocation4], 1

</llo_original>
